<compile_context>
chip_gen: v5e
topology: v5e:2x2
jax: 0.10.0
libtpu: 0.0.40
codegen_flags: <defaults>
</compile_context>

<pallas_src>
import functools

import jax
import jax.numpy as jnp
from jax.experimental import pallas as pl
from jax.experimental.pallas import tpu as pltpu


_CONTRAST = 1.5


def _round_up(x, m):
    return ((x + m - 1) // m) * m


def _choose_tile_h(h, w):
    """Row-tile height: largest multiple of 32 whose double-buffered working set
    (u8 input + f32 output) stays under ~30 MiB of VMEM."""
    w_lanes = _round_up(w, 128)              # internal VMEM lane padding of last dim
    budget = 30 * 1024 * 1024
    # bytes/step ~= 2 bufs * 3 ch * tH * w_lanes * (1 B u8 in + 4 B f32 out)
    th = budget // (30 * w_lanes)
    th = max(32, min(256, (th // 32) * 32))
    return h if th >= h else th              # full-height single block when it fits


# ---------------------------------------------------------------------------
# Pass 1: exact integer luminance sum.
#   gray = (19595*R + 38470*G + 7471*B + 0x8000) >> 16, accumulated in int32.
# ---------------------------------------------------------------------------
def _lum_sum_kernel(img_ref, total_ref, acc_ref, *, img_h, tile_h):
    i = pl.program_id(0)
    last = pl.num_programs(0) - 1

    @pl.when(i == 0)
    def _():
        acc_ref[0] = jnp.int32(0)

    r = img_ref[0].astype(jnp.int32)         # read channels separately: lower
    g = img_ref[1].astype(jnp.int32)         # vreg pressure at large tiles
    b = img_ref[2].astype(jnp.int32)
    lum = (19595 * r + 38470 * g + 7471 * b + 32768) >> 16

    if img_h % tile_h != 0:                  # static: a grid-partial row-block exists
        # Rows past the true image height hold undefined data in the final block:
        # mask them there (and only there) so the sum stays bit-exact.
        @pl.when(i == last)
        def _():
            rows = i * tile_h + jax.lax.broadcasted_iota(jnp.int32, lum.shape, 0)
            acc_ref[0] += jnp.sum(jnp.where(rows < img_h, lum, 0))

        @pl.when(i < last)
        def _():
            acc_ref[0] += jnp.sum(lum)
    else:
        acc_ref[0] += jnp.sum(lum)

    @pl.when(i == last)
    def _():
        total_ref[0] = acc_ref[0]


# ---------------------------------------------------------------------------
# Pass 2: blend with the mean, clip, truncate (PIL (UINT8) cast), ToTensor scale.
# ---------------------------------------------------------------------------
def _blend_kernel(mean_ref, img_ref, out_ref):
    mean_f = mean_ref[0].astype(jnp.float32)
    c = (1.0 - _CONTRAST) * mean_f           # folded: mean + a*(x-mean) = a*x + c
    inv255 = jnp.float32(1.0 / 255.0)
    for ch in range(3):                      # static unroll: per-channel vregs
        x = img_ref[ch].astype(jnp.float32)  # u8 -> f32 in-kernel
        y = jnp.clip(_CONTRAST * x + c, 0.0, 255.0)
        out_ref[ch] = jnp.floor(y) * inv255  # truncation then /255 (ToTensor)


@functools.partial(jax.jit, static_argnames=("tile_h",))
def enhance_forward(img_hwc_u8, tile_h=None):
    """(H, W, 3) uint8 RGB image -> (3, H, W) float32 in [0, 1] (ToTensor layout)."""
    H, W, C = img_hwc_u8.shape
    assert C == 3, "expects an RGB image"
    # TODO(synk): the int32 luminance sum overflows for images larger than ~8.4 MP;
    # split into hi/lo partial sums if such inputs are ever needed.

    tH = tile_h if tile_h is not None else _choose_tile_h(H, W)
    n_tiles = pl.cdiv(H, tH)

    # Channel-first uint8 view (6 B/px of XLA traffic).  No H/W padding: blocks use
    # the full trailing width and Pallas masks the partial final row-block, so no
    # extra pad / slice copy passes are needed around the kernels.
    img = jnp.transpose(img_hwc_u8, (2, 0, 1))           # (3, H, W) uint8

    # ---- pass 1: exact integer luminance sum -------------------------------
    total = pl.pallas_call(
        functools.partial(_lum_sum_kernel, img_h=H, tile_h=tH),
        out_shape=jax.ShapeDtypeStruct((1,), jnp.int32),
        grid_spec=pltpu.PrefetchScalarGridSpec(
            num_scalar_prefetch=0,
            grid=(n_tiles,),
            in_specs=[pl.BlockSpec((3, tH, W), lambda i: (0, i, 0))],
            out_specs=pl.BlockSpec(memory_space=pltpu.MemorySpace.SMEM),
            scratch_shapes=[pltpu.SMEM((1,), jnp.int32)],
        ),
        compiler_params=pltpu.CompilerParams(
            dimension_semantics=("arbitrary",),           # sequential accumulator
            vmem_limit_bytes=48 * 1024 * 1024,
        ),
    )(img)

    # mean_i = int(sum/N + 0.5), exactly: floor((sum + N//2) / N)   (N = pixel count).
    n = H * W
    mean_i = (total[0] + jnp.int32(n // 2)) // jnp.int32(n)
    mean_arr = jnp.reshape(mean_i, (1,)).astype(jnp.int32)

    # ---- pass 2: blend + ToTensor ------------------------------------------
    out = pl.pallas_call(
        _blend_kernel,
        out_shape=jax.ShapeDtypeStruct((3, H, W), jnp.float32),
        grid_spec=pltpu.PrefetchScalarGridSpec(
            num_scalar_prefetch=1,                        # mean as an SMEM scalar
            grid=(n_tiles,),
            in_specs=[pl.BlockSpec((3, tH, W), lambda i, m: (0, i, 0))],
            out_specs=pl.BlockSpec((3, tH, W), lambda i, m: (0, i, 0)),
        ),
        compiler_params=pltpu.CompilerParams(
            dimension_semantics=("parallel",),            # 2x on v7x (2 TCs)
            vmem_limit_bytes=48 * 1024 * 1024,
        ),
    )(mean_arr, img)

    return out


def _reference(img_hwc_u8):
    """Pure-JAX reference with the same PIL semantics."""
    x = img_hwc_u8.astype(jnp.int32)
    lum = (19595 * x[..., 0] + 38470 * x[..., 1] + 7471 * x[..., 2] + 32768) >> 16
    n = lum.shape[0] * lum.shape[1]
    mean_i = (jnp.sum(lum) + n // 2) // n
    m = mean_i.astype(jnp.float32)
    xf = jnp.transpose(img_hwc_u8, (2, 0, 1)).astype(jnp.float32)
    y = jnp.clip(m + _CONTRAST * (xf - m), 0.0, 255.0)
    return jnp.floor(y) / 255.0


if __name__ == "__main__":
    key = jax.random.PRNGKey(0)
    k1, k2, k3 = jax.random.split(key, 3)
    cases = [
        # small square image
        (jax.random.randint(k1, (16, 16, 3), 0, 256, dtype=jnp.int32).astype(jnp.uint8), None),
        # W not a multiple of 128: exercises the full-width (masked-store) path
        (jax.random.randint(k2, (40, 200, 3), 0, 256, dtype=jnp.int32).astype(jnp.uint8), None),
        # forced small row tile: exercises the grid-partial last block + row masking
        (jax.random.randint(k3, (72, 136, 3), 0, 256, dtype=jnp.int32).astype(jnp.uint8), 32),
    ]
    for img, th in cases:
        out = jax.block_until_ready(enhance_forward(img, tile_h=th))
        ref = jax.block_until_ready(_reference(img))
        assert out.shape == (3,) + img.shape[:2] and out.dtype == jnp.float32
        assert float(jnp.max(jnp.abs(out - ref))) <= 1e-6
    print("KERNEL_OK")
</pallas_src>

<mosaic_0001>
module attributes {stable_mosaic.version = 11 : i64} {
  func.func @_lum_sum_kernel(%arg0: i32, %arg1: memref<3x16x16xi8, #tpu.memory_space<vmem>>, %arg2: memref<1xi32, #tpu.memory_space<smem>>, %arg3: memref<1xi32, #tpu.memory_space<smem>>) attributes {dimension_semantics = [#tpu.dimension_semantics<arbitrary>], iteration_bounds = array<i64: 1>, scalar_prefetch = 0 : i64, scratch_operands = 1 : i64, tpu.core_type = #tpu.core_type<tc>, window_params = [{transform_indices = @transform_0, window_bounds = array<i64: 3, 16, 16>}, {transform_indices = @transform_1, window_bounds = array<i64: 1>}]} {
    %c0_i32 = arith.constant 0 : i32
    %0 = arith.cmpi eq, %arg0, %c0_i32 : i32
    %1 = arith.extui %0 : i1 to i32
    %c0_i32_0 = arith.constant 0 : i32
    %2 = arith.cmpi ne, %1, %c0_i32_0 : i32
    scf.if %2 {
      %c0_i32_11 = arith.constant 0 : i32
      %c0_12 = arith.constant 0 : index
      %34 = memref.load %arg3[%c0_12] : memref<1xi32, #tpu.memory_space<smem>>
      memref.store %c0_i32_11, %arg3[%c0_12] : memref<1xi32, #tpu.memory_space<smem>>
    } else {
    }
    %c0 = arith.constant 0 : index
    %c0_1 = arith.constant 0 : index
    %c0_2 = arith.constant 0 : index
    %3 = vector.load %arg1[%c0, %c0_1, %c0_2] : memref<3x16x16xi8, #tpu.memory_space<vmem>>, vector<1x16x16xi8>
    %4 = vector.shape_cast %3 : vector<1x16x16xi8> to vector<16x16xi8>
    %5 = arith.extui %4 : vector<16x16xi8> to vector<16x16xi32>
    %c1 = arith.constant 1 : index
    %c0_3 = arith.constant 0 : index
    %c0_4 = arith.constant 0 : index
    %6 = vector.load %arg1[%c1, %c0_3, %c0_4] : memref<3x16x16xi8, #tpu.memory_space<vmem>>, vector<1x16x16xi8>
    %7 = vector.shape_cast %6 : vector<1x16x16xi8> to vector<16x16xi8>
    %8 = arith.extui %7 : vector<16x16xi8> to vector<16x16xi32>
    %c2 = arith.constant 2 : index
    %c0_5 = arith.constant 0 : index
    %c0_6 = arith.constant 0 : index
    %9 = vector.load %arg1[%c2, %c0_5, %c0_6] : memref<3x16x16xi8, #tpu.memory_space<vmem>>, vector<1x16x16xi8>
    %10 = vector.shape_cast %9 : vector<1x16x16xi8> to vector<16x16xi8>
    %11 = arith.extui %10 : vector<16x16xi8> to vector<16x16xi32>
    %c19595_i32 = arith.constant 19595 : i32
    %12 = vector.broadcast %c19595_i32 : i32 to vector<16x16xi32>
    %13 = arith.muli %12, %5 : vector<16x16xi32>
    %c38470_i32 = arith.constant 38470 : i32
    %14 = vector.broadcast %c38470_i32 : i32 to vector<16x16xi32>
    %15 = arith.muli %14, %8 : vector<16x16xi32>
    %16 = arith.addi %13, %15 : vector<16x16xi32>
    %c7471_i32 = arith.constant 7471 : i32
    %17 = vector.broadcast %c7471_i32 : i32 to vector<16x16xi32>
    %18 = arith.muli %17, %11 : vector<16x16xi32>
    %19 = arith.addi %16, %18 : vector<16x16xi32>
    %c32768_i32 = arith.constant 32768 : i32
    %20 = vector.broadcast %c32768_i32 : i32 to vector<16x16xi32>
    %21 = arith.addi %19, %20 : vector<16x16xi32>
    %c16_i32 = arith.constant 16 : i32
    %22 = vector.broadcast %c16_i32 : i32 to vector<16x16xi32>
    %23 = arith.shrsi %21, %22 : vector<16x16xi32>
    %c0_7 = arith.constant 0 : index
    %24 = memref.load %arg3[%c0_7] : memref<1xi32, #tpu.memory_space<smem>>
    %25 = vector.shape_cast %23 : vector<16x16xi32> to vector<1x16x16xi32>
    %cst = arith.constant dense<0> : vector<1xi32>
    %26 = vector.multi_reduction <add>, %25, %cst [1, 2] : vector<1x16x16xi32> to vector<1xi32>
    %27 = vector.shape_cast %26 : vector<1xi32> to vector<1x1x1xi32>
    %28 = vector.extract %27[0, 0, 0] : i32 from vector<1x1x1xi32>
    %29 = arith.addi %24, %28 : i32
    %c0_8 = arith.constant 0 : index
    %30 = memref.load %arg3[%c0_8] : memref<1xi32, #tpu.memory_space<smem>>
    memref.store %29, %arg3[%c0_8] : memref<1xi32, #tpu.memory_space<smem>>
    %c0_i32_9 = arith.constant 0 : i32
    %31 = arith.cmpi eq, %arg0, %c0_i32_9 : i32
    %32 = arith.extui %31 : i1 to i32
    %c0_i32_10 = arith.constant 0 : i32
    %33 = arith.cmpi ne, %32, %c0_i32_10 : i32
    scf.if %33 {
      %c0_11 = arith.constant 0 : index
      %34 = memref.load %arg3[%c0_11] : memref<1xi32, #tpu.memory_space<smem>>
      %c0_12 = arith.constant 0 : index
      %35 = memref.load %arg2[%c0_12] : memref<1xi32, #tpu.memory_space<smem>>
      memref.store %34, %arg2[%c0_12] : memref<1xi32, #tpu.memory_space<smem>>
    } else {
    }
    return
  }
  func.func @transform_0(%arg0: i32) -> (i32, i32, i32) {
    %c0_i32 = arith.constant 0 : i32
    %c0_i32_0 = arith.constant 0 : i32
    %c0_i32_1 = arith.constant 0 : i32
    return %c0_i32, %arg0, %c0_i32_0 : i32, i32, i32
  }
  func.func @transform_1(%arg0: i32) -> i32 {
    %c0_i32 = arith.constant 0 : i32
    %c0_i32_0 = arith.constant 0 : i32
    return %c0_i32 : i32
  }
}

module attributes {stable_mosaic.version = 11 : i64} {
  func.func @_blend_kernel(%arg0: i32, %arg1: memref<1xi32, #tpu.memory_space<smem>>, %arg2: memref<3x16x16xi8, #tpu.memory_space<vmem>>, %arg3: memref<3x16x16xf32, #tpu.memory_space<vmem>>) attributes {dimension_semantics = [#tpu.dimension_semantics<parallel>], iteration_bounds = array<i64: 1>, scalar_prefetch = 1 : i64, scratch_operands = 0 : i64, tpu.core_type = #tpu.core_type<tc>, window_params = [{transform_indices = @transform_0, window_bounds = array<i64: 3, 16, 16>}, {transform_indices = @transform_1, window_bounds = array<i64: 3, 16, 16>}]} {
    %c0 = arith.constant 0 : index
    %0 = memref.load %arg1[%c0] : memref<1xi32, #tpu.memory_space<smem>>
    %1 = arith.sitofp %0 : i32 to f32
    %cst = arith.constant -5.000000e-01 : f32
    %2 = arith.mulf %cst, %1 : f32
    %c0_0 = arith.constant 0 : index
    %c0_1 = arith.constant 0 : index
    %c0_2 = arith.constant 0 : index
    %3 = vector.load %arg2[%c0_0, %c0_1, %c0_2] : memref<3x16x16xi8, #tpu.memory_space<vmem>>, vector<1x16x16xi8>
    %4 = vector.shape_cast %3 : vector<1x16x16xi8> to vector<16x16xi8>
    %5 = arith.uitofp %4 : vector<16x16xi8> to vector<16x16xf32>
    %cst_3 = arith.constant 1.500000e+00 : f32
    %6 = vector.broadcast %cst_3 : f32 to vector<16x16xf32>
    %7 = arith.mulf %6, %5 : vector<16x16xf32>
    %8 = vector.broadcast %2 : f32 to vector<16x16xf32>
    %9 = arith.addf %7, %8 : vector<16x16xf32>
    %cst_4 = arith.constant 0.000000e+00 : f32
    %cst_5 = arith.constant 2.550000e+02 : f32
    %10 = vector.broadcast %cst_4 : f32 to vector<16x16xf32>
    %11 = arith.maximumf %10, %9 : vector<16x16xf32>
    %12 = vector.broadcast %cst_5 : f32 to vector<16x16xf32>
    %13 = arith.minimumf %12, %11 : vector<16x16xf32>
    %14 = math.floor %13 : vector<16x16xf32>
    %cst_6 = arith.constant 0.00392156886 : f32
    %15 = vector.broadcast %cst_6 : f32 to vector<16x16xf32>
    %16 = arith.mulf %14, %15 : vector<16x16xf32>
    %c0_7 = arith.constant 0 : index
    %c0_8 = arith.constant 0 : index
    %c0_9 = arith.constant 0 : index
    %17 = vector.load %arg3[%c0_7, %c0_8, %c0_9] : memref<3x16x16xf32, #tpu.memory_space<vmem>>, vector<1x16x16xf32>
    %18 = vector.shape_cast %17 : vector<1x16x16xf32> to vector<16x16xf32>
    %19 = vector.shape_cast %16 : vector<16x16xf32> to vector<1x16x16xf32>
    tpu.vector_store %arg3[%c0_7, %c0_8, %c0_9], %19 {strides = array<i32>} : memref<3x16x16xf32, #tpu.memory_space<vmem>>, vector<1x16x16xf32>,
    %c1 = arith.constant 1 : index
    %c0_10 = arith.constant 0 : index
    %c0_11 = arith.constant 0 : index
    %20 = vector.load %arg2[%c1, %c0_10, %c0_11] : memref<3x16x16xi8, #tpu.memory_space<vmem>>, vector<1x16x16xi8>
    %21 = vector.shape_cast %20 : vector<1x16x16xi8> to vector<16x16xi8>
    %22 = arith.uitofp %21 : vector<16x16xi8> to vector<16x16xf32>
    %cst_12 = arith.constant 1.500000e+00 : f32
    %23 = vector.broadcast %cst_12 : f32 to vector<16x16xf32>
    %24 = arith.mulf %23, %22 : vector<16x16xf32>
    %25 = vector.broadcast %2 : f32 to vector<16x16xf32>
    %26 = arith.addf %24, %25 : vector<16x16xf32>
    %cst_13 = arith.constant 0.000000e+00 : f32
    %cst_14 = arith.constant 2.550000e+02 : f32
    %27 = vector.broadcast %cst_13 : f32 to vector<16x16xf32>
    %28 = arith.maximumf %27, %26 : vector<16x16xf32>
    %29 = vector.broadcast %cst_14 : f32 to vector<16x16xf32>
    %30 = arith.minimumf %29, %28 : vector<16x16xf32>
    %31 = math.floor %30 : vector<16x16xf32>
    %cst_15 = arith.constant 0.00392156886 : f32
    %32 = vector.broadcast %cst_15 : f32 to vector<16x16xf32>
    %33 = arith.mulf %31, %32 : vector<16x16xf32>
    %c1_16 = arith.constant 1 : index
    %c0_17 = arith.constant 0 : index
    %c0_18 = arith.constant 0 : index
    %34 = vector.load %arg3[%c1_16, %c0_17, %c0_18] : memref<3x16x16xf32, #tpu.memory_space<vmem>>, vector<1x16x16xf32>
    %35 = vector.shape_cast %34 : vector<1x16x16xf32> to vector<16x16xf32>
    %36 = vector.shape_cast %33 : vector<16x16xf32> to vector<1x16x16xf32>
    tpu.vector_store %arg3[%c1_16, %c0_17, %c0_18], %36 {strides = array<i32>} : memref<3x16x16xf32, #tpu.memory_space<vmem>>, vector<1x16x16xf32>,
    %c2 = arith.constant 2 : index
    %c0_19 = arith.constant 0 : index
    %c0_20 = arith.constant 0 : index
    %37 = vector.load %arg2[%c2, %c0_19, %c0_20] : memref<3x16x16xi8, #tpu.memory_space<vmem>>, vector<1x16x16xi8>
    %38 = vector.shape_cast %37 : vector<1x16x16xi8> to vector<16x16xi8>
    %39 = arith.uitofp %38 : vector<16x16xi8> to vector<16x16xf32>
    %cst_21 = arith.constant 1.500000e+00 : f32
    %40 = vector.broadcast %cst_21 : f32 to vector<16x16xf32>
    %41 = arith.mulf %40, %39 : vector<16x16xf32>
    %42 = vector.broadcast %2 : f32 to vector<16x16xf32>
    %43 = arith.addf %41, %42 : vector<16x16xf32>
    %cst_22 = arith.constant 0.000000e+00 : f32
    %cst_23 = arith.constant 2.550000e+02 : f32
    %44 = vector.broadcast %cst_22 : f32 to vector<16x16xf32>
    %45 = arith.maximumf %44, %43 : vector<16x16xf32>
    %46 = vector.broadcast %cst_23 : f32 to vector<16x16xf32>
    %47 = arith.minimumf %46, %45 : vector<16x16xf32>
    %48 = math.floor %47 : vector<16x16xf32>
    %cst_24 = arith.constant 0.00392156886 : f32
    %49 = vector.broadcast %cst_24 : f32 to vector<16x16xf32>
    %50 = arith.mulf %48, %49 : vector<16x16xf32>
    %c2_25 = arith.constant 2 : index
    %c0_26 = arith.constant 0 : index
    %c0_27 = arith.constant 0 : index
    %51 = vector.load %arg3[%c2_25, %c0_26, %c0_27] : memref<3x16x16xf32, #tpu.memory_space<vmem>>, vector<1x16x16xf32>
    %52 = vector.shape_cast %51 : vector<1x16x16xf32> to vector<16x16xf32>
    %53 = vector.shape_cast %50 : vector<16x16xf32> to vector<1x16x16xf32>
    tpu.vector_store %arg3[%c2_25, %c0_26, %c0_27], %53 {strides = array<i32>} : memref<3x16x16xf32, #tpu.memory_space<vmem>>, vector<1x16x16xf32>,
    return
  }
  func.func @transform_0(%arg0: i32, %arg1: memref<1xi32, #tpu.memory_space<smem>>) -> (i32, i32, i32) {
    %c0_i32 = arith.constant 0 : i32
    %c0_i32_0 = arith.constant 0 : i32
    %c0_i32_1 = arith.constant 0 : i32
    return %c0_i32, %arg0, %c0_i32_0 : i32, i32, i32
  }
  func.func @transform_1(%arg0: i32, %arg1: memref<1xi32, #tpu.memory_space<smem>>) -> (i32, i32, i32) {
    %c0_i32 = arith.constant 0 : i32
    %c0_i32_0 = arith.constant 0 : i32
    %c0_i32_1 = arith.constant 0 : i32
    return %c0_i32, %arg0, %c0_i32_0 : i32, i32, i32
  }
}

</mosaic_0001>

<llo_original>
// kernel: enhance_forward.3
$region0: #{enhance_forward.3}
  #allocation0 [shape = 'u32[]', space=smem, size = 0x4, offset = 0x4, fixed_abs, tag = 'smem constant byte address 0x4 - core index']
  #allocation1 [shape = 'u32[72,128]{1,0:T(1,128)}', space=vmem, size = 0x9000, scoped, tag = 'internal scratch']
  #allocation2 [shape = 's32[1]{0}', space=sflag, size = 0x4, scoped, tag = 'scoped memory for enhance_forward.3']
  #allocation3 [shape = 's32[1]{0:T(128)S(6)}', space=smem, size = 0x200, scoped, tag = 'prefetched SMEM operand 0']
  %s0 = inlined_call_operand.<no memory space> [shape: s32[1], index: 0, kind: input, shape index: {}]
  %s1 = inlined_call_operand.vmem [shape: u8[3,16,16], index: 1, kind: input, shape index: {}]
  %s2 = inlined_call_operand.hbm [shape: f32[3,16,16], index: 2, kind: output, shape index: {}]
  %s3 = sld [smem:[#allocation0]]
  $region14: #{enhance_forward.3} parent=0
    _
  %s5 = ssub.s32 1, %s3
  %s6 = scalar_select 0, %s5, %s3
  %7 = sst [smem:[#allocation3]] %s0
  $region1: #{enhance_forward.3} parent=0
    #allocation4 [shape = 'u8[24576]{0}', space=vmem, size = 0x6000, scoped, tag = 'output window, operand 0, single buffered']
    #allocation5 [shape = 's32[1]{0}', space=sflag, size = 0x4, scoped, tag = 'scoped memory for enhance_forward.3']
    %8 = vsyncpa [#allocation5], 0
    // Predicated region
    $region2: #{enhance_forward.3} parent=1 // pred_check
      _
    $region3: #{enhance_forward.3} parent=1 // pred_check_branch
      %10 = sbr.rel (0) target = $region5
    $region4: #{enhance_forward.3} parent=1 // pred_region
      _
    $region5: #{enhance_forward.3} parent=1 // pred_fallthru
      _
    %s11 = sld [smem:[#allocation3]]
    %s12 = scvt.s32.f32 %s11
    %s13 = smul.f32 %s12, -0.5
    %v14 = vld [vmem:[%s1] sm:$0x3]
    %v15 = vld [vmem:[%s1 + $0x2] sm:$0x3]
    %v16 = vunpack.c.0.s8 %v14
    %v17 = vunpack.c.0.s8 %v15
    %v18 = vand.u32 %v16, 255
    %v19 = vand.u32 %v17, 255
    %v20 = vcvt.s32.f32 %v18
    %v21 = vcvt.s32.f32 %v19
    %v22 = vmul.f32 %v20, 1.5
    %v23 = vmul.f32 %v21, 1.5
    %v24 = vstv %s13
    %v25 = vadd.f32 %v22, %v24
    %v26 = vadd.f32 %v23, %v24
    %v27 = vmax.f32 %v25, 0.0
    %v28 = vmax.f32 %v26, 0.0
    %v29 = vmin.f32 %v27, 255.0
    %v30 = vmin.f32 %v28, 255.0
    %v31 = vfloor.f32 %v29
    %v32 = vfloor.f32 %v30
    %v33 = vmul.f32 %v31, 0.003921569
    %v34 = vmul.f32 %v32, 0.003921569
    %vm35 = vcmask 130048
    %36 = vst.msk [vmem:[#allocation4] sm:$0xff] %vm35, %v33
    %37 = vst.msk [vmem:[#allocation4 + $0x8] sm:$0xff] %vm35, %v34
    %s38 = scalar_lea.vmem %s1, 4
    %v39 = vld [vmem:[%s38] sm:$0x3]
    %v40 = vld [vmem:[%s38 + $0x2] sm:$0x3]
    %v41 = vunpack.c.0.s8 %v39
    %v42 = vunpack.c.0.s8 %v40
    %v43 = vand.u32 %v41, 255
    %v44 = vand.u32 %v42, 255
    %v45 = vcvt.s32.f32 %v43
    %v46 = vcvt.s32.f32 %v44
    %v47 = vmul.f32 %v45, 1.5
    %v48 = vmul.f32 %v46, 1.5
    %v49 = vadd.f32 %v47, %v24
    %v50 = vadd.f32 %v48, %v24
    %v51 = vmax.f32 %v49, 0.0
    %v52 = vmax.f32 %v50, 0.0
    %v53 = vmin.f32 %v51, 255.0
    %v54 = vmin.f32 %v52, 255.0
    %v55 = vfloor.f32 %v53
    %v56 = vfloor.f32 %v54
    %v57 = vmul.f32 %v55, 0.003921569
    %v58 = vmul.f32 %v56, 0.003921569
    %s59 = scalar_lea.vmem [#allocation4], 16
    %60 = vst.msk [vmem:[%s59] sm:$0xff] %vm35, %v57
    %61 = vst.msk [vmem:[%s59 + $0x8] sm:$0xff] %vm35, %v58
    %s62 = scalar_lea.vmem %s1, 8
    %v63 = vld [vmem:[%s62] sm:$0x3]
    %v64 = vld [vmem:[%s62 + $0x2] sm:$0x3]
    %v65 = vunpack.c.0.s8 %v63
    %v66 = vunpack.c.0.s8 %v64
    %v67 = vand.u32 %v65, 255
    %v68 = vand.u32 %v66, 255
    %v69 = vcvt.s32.f32 %v67
    %v70 = vcvt.s32.f32 %v68
    %v71 = vmul.f32 %v69, 1.5
    %v72 = vmul.f32 %v70, 1.5
    %v73 = vadd.f32 %v71, %v24
    %v74 = vadd.f32 %v72, %v24
    %v75 = vmax.f32 %v73, 0.0
    %v76 = vmax.f32 %v74, 0.0
    %v77 = vmin.f32 %v75, 255.0
    %v78 = vmin.f32 %v76, 255.0
    %v79 = vfloor.f32 %v77
    %v80 = vfloor.f32 %v78
    %v81 = vmul.f32 %v79, 0.003921569
    %v82 = vmul.f32 %v80, 0.003921569
    %s83 = scalar_lea.vmem [#allocation4], 32
    %84 = vst.msk [vmem:[%s83] sm:$0xff] %vm35, %v81
    %85 = vst.msk [vmem:[%s83 + $0x8] sm:$0xff] %vm35, %v82
    // Predicated region
    $region6: #{enhance_forward.3} parent=1 // pred_check
      _
    $region7: #{enhance_forward.3} parent=1 // pred_check_branch
      %87 = sbr.rel (0) target = $region9
    $region8: #{enhance_forward.3} parent=1 // pred_region
      %89 = vsyncadd [#allocation5], 0
      %s90 = sshll.u32 [#allocation4], 4
      %s91 = int_to_ptr.vmem [resolvable:$true] %s90
      %s92 = sshll.u32 %s2, 4
      %s93 = int_to_ptr.hbm [resolvable:$true] %s92
      %98 = dma.vmem_to_hbm [thread:$0]  %s91, 768, %s93, [#allocation5], 128, 128, 8
    $region9: #{enhance_forward.3} parent=1 // pred_fallthru
      _
    // Predicated region
    $region10: #{enhance_forward.3} parent=1 // pred_check
      _
    $region11: #{enhance_forward.3} parent=1 // pred_check_branch
      %100 = sbr.rel (0) target = $region13
    $region12: #{enhance_forward.3} parent=1 // pred_region
      %102 = dma.done [#allocation5], 768
    $region13: #{enhance_forward.3} parent=1 // pred_fallthru
      _
    %103 = vsyncpa [#allocation5], 1

// kernel: enhance_forward.2
$region0: #{enhance_forward.2}
  #allocation0 [shape = 'u32[]', space=smem, size = 0x4, offset = 0x4, fixed_abs, tag = 'smem constant byte address 0x4 - core index']
  #allocation1 [shape = 'u32[72,128]{1,0:T(1,128)}', space=vmem, size = 0x9000, scoped, tag = 'internal scratch']
  #allocation2 [shape = 's32[1]{0:T(128)}', space=smem, size = 0x200, scoped, tag = 'scratch operand']
  %s0 = inlined_call_operand.hbm [shape: u8[3,16,16], index: 0, kind: input, shape index: {}]
  %s1 = inlined_call_operand.hbm [shape: s32[1], index: 1, kind: output, shape index: {}]
  %s2 = sld [smem:[#allocation0]]
  $region26: #{enhance_forward.2} parent=0
    _
  %s4 = ssub.s32 1, %s2
  %s5 = scalar_select 0, %s4, %s2
  $region1: #{enhance_forward.2} parent=0
    #allocation3 [shape = 'u8[6144]{0}', space=vmem, size = 0x1800, scoped, tag = 'input window, operand 0, single buffered']
    #allocation4 [shape = 's32[1]{0}', space=sflag, size = 0x4, scoped, tag = 'scoped memory for enhance_forward.2']
    #allocation5 [shape = 's32[1]{0}', space=sflag, size = 0x4, scoped, tag = 'scoped memory for enhance_forward.2']
    #allocation6 [shape = 'u8[512]{0}', space=smem, size = 0x200, scoped, tag = 'output window, operand 0, single buffered']
    %6 = vsyncpa [#allocation4], 0
    %7 = vsyncpa [#allocation5], 0
    // Predicated region
    $region2: #{enhance_forward.2} parent=1 // pred_check
      _
    $region3: #{enhance_forward.2} parent=1 // pred_check_branch
      %9 = sbr.rel (0) target = $region5
    $region4: #{enhance_forward.2} parent=1 // pred_region
      %11 = vsyncadd [#allocation4], 0
      %s12 = sshll.u32 %s0, 4
      %s13 = int_to_ptr.hbm [resolvable:$true] %s12
      %s14 = sshll.u32 [#allocation3], 4
      %s15 = int_to_ptr.vmem [resolvable:$true] %s14
      %20 = dma.hbm_to_vmem [thread:$0]  %s13, 192, %s15, [#allocation4], 32, 32, 2
    $region5: #{enhance_forward.2} parent=1 // pred_fallthru
      _
    // Predicated region
    $region6: #{enhance_forward.2} parent=1 // pred_check
      _
    $region7: #{enhance_forward.2} parent=1 // pred_check_branch
      %22 = sbr.rel (0) target = $region9
    $region8: #{enhance_forward.2} parent=1 // pred_region
      %24 = dma.done [#allocation4], 192
    $region9: #{enhance_forward.2} parent=1 // pred_fallthru
      _
    %p25 = scmp.eq.s32.totalorder 0, 0
    // Predicated region
    $region10: #{enhance_forward.2} parent=1 // pred_check
      %p26 = pneg %p25
    $region11: #{enhance_forward.2} parent=1 // pred_check_branch
      %28 = sbr.rel (%p26) target = $region13
    $region12: #{enhance_forward.2} parent=1 // pred_region
      %s29 = scalar_lea.smem [#allocation2], 0
      %30 = sst [smem:[%s29]] 0
    $region13: #{enhance_forward.2} parent=1 // pred_fallthru
      _
    %v31 = vld [vmem:[#allocation3] sm:$0x3]
    %v32 = vld [vmem:[#allocation3 + $0x2] sm:$0x3]
    %v33 = vunpack.c.0.s8 %v31
    %v34 = vunpack.c.0.s8 %v32
    %v35 = vand.u32 %v33, 255
    %v36 = vand.u32 %v34, 255
    %s37 = scalar_lea.vmem [#allocation3], 4
    %v38 = vld [vmem:[%s37] sm:$0x3]
    %v39 = vld [vmem:[%s37 + $0x2] sm:$0x3]
    %v40 = vunpack.c.0.s8 %v38
    %v41 = vunpack.c.0.s8 %v39
    %v42 = vand.u32 %v40, 255
    %v43 = vand.u32 %v41, 255
    %s44 = scalar_lea.vmem [#allocation3], 8
    %v45 = vld [vmem:[%s44] sm:$0x3]
    %v46 = vld [vmem:[%s44 + $0x2] sm:$0x3]
    %v47 = vunpack.c.0.s8 %v45
    %v48 = vunpack.c.0.s8 %v46
    %v49 = vand.u32 %v47, 255
    %v50 = vand.u32 %v48, 255
    %v51 = vmul.u32 %v35, 19595
    %v52 = vmul.u32 %v36, 19595
    %v53 = vmul.u32 %v42, 38470
    %v54 = vmul.u32 %v43, 38470
    %v55 = vadd.s32 %v51, %v53
    %v56 = vadd.s32 %v52, %v54
    %v57 = vmul.u32 %v49, 7471
    %v58 = vmul.u32 %v50, 7471
    %v59 = vadd.s32 %v55, %v57
    %v60 = vadd.s32 %v56, %v58
    %v61 = vadd.s32 %v59, 32768
    %v62 = vadd.s32 %v60, 32768
    %v63 = vshra.s32 %v61, 16
    %v64 = vshra.s32 %v62, 16
    %s65 = sld [smem:[#allocation2]]
    %vm66 = vcmask 130048
    %v67 = vsel %vm66, %v63, 0
    %v68 = vsel %vm66, %v64, 0
    %v69 = vadd.s32 %v67, %v68
    %v70 = vand.u32 %v69, 65535
    %v71 = vshrl.u32 %v69, 16
    %v72 = vcvt.s32.f32 %v70
    %v73 = vcvt.s32.f32 %v71
    %74 = vadd.xlane.f32.xlu0 %v72
    %v75 = vpop.xlane.xlu0 %74
    %76 = vadd.xlane.f32.xlu0 %v73
    %v77 = vpop.xlane.xlu0 %76
    %v78 = vcvt.f32.s32 %v75
    %v79 = vcvt.f32.s32 %v77
    %v80 = vshll.u32 %v79, 16
    %v81 = vadd.s32 %v80, %v78
    %v82 = vrot.slane %v81, 4
    %v83 = vadd.s32 %v81, %v82
    %v84 = vrot.slane %v83, 2
    %v85 = vadd.s32 %v83, %v84
    %v86 = vrot.slane %v85, 1
    %v87 = vadd.s32 %v85, %v86
    %s88 = vtos %v87
    %s89 = sadd.s32 %s65, %s88
    %s90 = scalar_lea.smem [#allocation2], 0
    %91 = sst [smem:[%s90]] %s89
    // Predicated region
    $region14: #{enhance_forward.2} parent=1 // pred_check
      %p92 = pneg %p25
    $region15: #{enhance_forward.2} parent=1 // pred_check_branch
      %94 = sbr.rel (%p92) target = $region17
    $region16: #{enhance_forward.2} parent=1 // pred_region
      %s95 = sld [smem:[#allocation2]]
      %s96 = scalar_lea.smem [#allocation6], 0
      %97 = sst [smem:[%s96]] %s95
    $region17: #{enhance_forward.2} parent=1 // pred_fallthru
      _
    // Predicated region
    $region18: #{enhance_forward.2} parent=1 // pred_check
      _
    $region19: #{enhance_forward.2} parent=1 // pred_check_branch
      %99 = sbr.rel (0) target = $region21
    $region20: #{enhance_forward.2} parent=1 // pred_region
      %101 = vsyncadd [#allocation5], 0
      %s103 = sshll.u32 %s1, 4
      %s104 = int_to_ptr.hbm [resolvable:$true] %s103
      %106 = dma.smem_to_hbm [#allocation6], 16, %s104, [#allocation5]
    $region21: #{enhance_forward.2} parent=1 // pred_fallthru
      _
    // Predicated region
    $region22: #{enhance_forward.2} parent=1 // pred_check
      _
    $region23: #{enhance_forward.2} parent=1 // pred_check_branch
      %108 = sbr.rel (0) target = $region25
    $region24: #{enhance_forward.2} parent=1 // pred_region
      %110 = dma.done [#allocation5], 16
    $region25: #{enhance_forward.2} parent=1 // pred_fallthru
      _
    %111 = sfence
    %112 = vsyncpa [#allocation4], 1
    %113 = vsyncpa [#allocation5], 1

</llo_original>
